<compile_context>
chip_gen: v7x
topology: tpu7x:2x2x1
jax: 0.10.0
libtpu: 0.0.40
codegen_flags: <defaults>
</compile_context>

<pallas_src>
import jax
import jax.numpy as jnp
from jax.experimental import pallas as pl
from jax.experimental.pallas import tpu as pltpu


def _round_up(x, m):
    return (x + m - 1) // m * m


def _patch_embed_kernel(x_ref, w_ref, b_ref, o_ref):
    # x_ref: (tm, K) bf16 patch tile; w_ref: (K, Np) bf16 resident weight;
    # b_ref: (1, Np) f32 bias. One MXU matmul with f32 accumulation, bias add
    # on the VPU, single store per tile (no K accumulator / init-finalize).
    acc = jnp.dot(x_ref[...], w_ref[...], preferred_element_type=jnp.float32)
    o_ref[...] = (acc + b_ref[...]).astype(o_ref.dtype)


def patch_embedding(x, weight, bias, *, patch_size, block_m=1024,
                    compute_dtype=jnp.bfloat16, out_dtype=None):
    """ViT PatchEmbedding forward.

    x: (B, C, H, W) NCHW.  weight: (emb_dim, C, P, P).  bias: (emb_dim,).
    Returns (B, num_patches, emb_dim), matching
    Conv2d(stride=P) -> flatten(2) -> transpose(1, 2) of the PyTorch module.
    On v6e pass out_dtype=jnp.bfloat16 to halve output HBM writeback.
    """
    B, C, H, W = x.shape
    emb_dim = weight.shape[0]
    P = patch_size
    nph, npw = H // P, W // P
    num_patches = nph * npw
    out_dtype = x.dtype if out_dtype is None else out_dtype

    # --- patch extraction in (c, ph, pw) feature order to match the flattened
    # Conv2d weight. allow_input_fusion below asks XLA to fuse this
    # reshape/transpose/cast chain into the kernel's operand-0 DMA.
    # TODO(synk): if xprof shows this 6-D transpose materialized, feed NHWC
    # activations upstream (patchification becomes nearly transpose-free) and
    # permute the tiny weight's K axis instead of the big activation tensor.
    patches = x.reshape(B, C, nph, P, npw, P)
    patches = patches.transpose(0, 2, 4, 1, 3, 5)            # (B, nph, npw, C, P, P)
    patches = patches.reshape(B * num_patches, C * P * P)    # (M, K)
    patches = patches.astype(compute_dtype)

    w_mat = weight.reshape(emb_dim, C * P * P).T.astype(compute_dtype)  # (K, N)
    b_mat = bias.astype(jnp.float32).reshape(1, emb_dim)                # (1, N)

    M, K = patches.shape
    N = emb_dim

    # Lane-dense output: pad only the (tiny) weight/bias along N to a multiple
    # of 128.  K and M are NOT padded — full-extent K blocks are legal, and a
    # partial last M block is handled with masked boundary stores.
    Np = _round_up(N, 128)
    if Np != N:
        w_mat = jnp.pad(w_mat, ((0, 0), (0, Np - N)))
        b_mat = jnp.pad(b_mat, ((0, 0), (0, Np - N)))

    # M tiling: one full-extent tile if it fits, otherwise even-ish blocks
    # (multiple of 8 sublanes) so both v7x TensorCores get balanced work.
    if M <= block_m:
        tm, grid_m = M, 1
    else:
        grid_m = pl.cdiv(M, block_m)
        tm = _round_up(pl.cdiv(M, grid_m), 8)
        grid_m = pl.cdiv(M, tm)

    cbytes = jnp.dtype(compute_dtype).itemsize
    obytes = jnp.dtype(out_dtype).itemsize
    # Double-buffered patches + output tiles, (up to) double-buffered weight,
    # bias padded to 8 sublanes. Headroom for compiler-internal scratch.
    vmem_needed = (2 * tm * K * cbytes + 2 * K * Np * cbytes
                   + 2 * 8 * Np * 4 + 2 * tm * Np * obytes)
    vmem_limit = int(min(max(32 << 20, int(1.5 * vmem_needed)), 100 << 20))

    cost = pl.CostEstimate(
        flops=2 * M * K * N,
        transcendentals=0,
        bytes_accessed=M * K * cbytes + K * Np * cbytes + M * Np * obytes)

    def _call(single_buffer_resident):
        # Constant index_map blocks are fetched once; Buffered(1) drops their
        # second VMEM copy (frees headroom for larger M tiles on v7x's 64 MiB).
        resident = ({"pipeline_mode": pl.Buffered(1)}
                    if single_buffer_resident else {})
        in_specs = [
            pl.BlockSpec((tm, K), lambda i: (i, 0)),              # patches: tiled over M
            pl.BlockSpec((K, Np), lambda i: (0, 0), **resident),  # weight: VMEM-resident
            pl.BlockSpec((1, Np), lambda i: (0, 0), **resident),  # bias:   VMEM-resident
        ]
        return pl.pallas_call(
            _patch_embed_kernel,
            out_shape=jax.ShapeDtypeStruct((M, Np), out_dtype),
            grid_spec=pltpu.PrefetchScalarGridSpec(
                num_scalar_prefetch=0,
                grid=(grid_m,),
                in_specs=in_specs,
                out_specs=pl.BlockSpec((tm, Np), lambda i: (i, 0)),
            ),
            compiler_params=pltpu.CompilerParams(
                dimension_semantics=("parallel",),            # megacore sharding on v7x
                allow_input_fusion=[True, False, False],      # fuse patch transpose DMA
                vmem_limit_bytes=vmem_limit,                  # covers v5e's 16 MiB default
            ),
            cost_estimate=cost,
        )(patches, w_mat, b_mat)

    try:
        out = _call(True)
    except Exception:
        # Older Pallas without pipeline_mode/Buffered support on pallas_call.
        out = _call(False)

    if Np != N:
        out = out[:, :N]
    return out.reshape(B, num_patches, emb_dim)


if __name__ == "__main__":
    # Small config consistent with the module: img_size=16, patch_size=4,
    # in_channels=3 (fixed by the module), emb_dim=32, batch=2.
    img_size, patch_size, emb_dim, batch = 16, 4, 32, 2
    num_patches = (img_size // patch_size) ** 2

    key = jax.random.PRNGKey(0)
    kx, kw, kb = jax.random.split(key, 3)

    x = jax.random.normal(kx, (batch, 3, img_size, img_size), dtype=jnp.float32)
    weight = jax.random.normal(
        kw, (emb_dim, 3, patch_size, patch_size), dtype=jnp.float32) * 0.02
    bias = jax.random.normal(kb, (emb_dim,), dtype=jnp.float32) * 0.02

    out = patch_embedding(x, weight, bias, patch_size=patch_size)
    out = jax.block_until_ready(out)
    assert out.shape == (batch, num_patches, emb_dim)

    # Reference: plain-JAX conv (stride == kernel), highest precision f32.
    ref = jax.lax.conv_general_dilated(
        x, weight, window_strides=(patch_size, patch_size), padding="VALID",
        dimension_numbers=("NCHW", "OIHW", "NCHW"),
        precision=jax.lax.Precision.HIGHEST)
    ref = ref + bias.reshape(1, emb_dim, 1, 1)
    ref = ref.reshape(batch, emb_dim, num_patches).transpose(0, 2, 1)

    # Kernel feeds the MXU bf16 inputs (f32 accumulate), so allow bf16-level
    # tolerance against the f32 reference.
    assert jnp.allclose(out, ref, atol=2e-2, rtol=2e-2)
    print("KERNEL_OK")
</pallas_src>

<mosaic_0001>
module attributes {stable_mosaic.version = 11 : i64} {
  func.func @_patch_embed_kernel(%arg0: i32, %arg1: memref<32x48xbf16, #tpu.memory_space<vmem>>, %arg2: memref<48x128xbf16, #tpu.memory_space<vmem>>, %arg3: memref<1x128xf32, #tpu.memory_space<vmem>>, %arg4: memref<32x128xf32, #tpu.memory_space<vmem>>) attributes {dimension_semantics = [#tpu.dimension_semantics<parallel>], iteration_bounds = array<i64: 1>, scalar_prefetch = 0 : i64, scratch_operands = 0 : i64, tpu.core_type = #tpu.core_type<tc>, window_params = [{transform_indices = @transform_0, window_bounds = array<i64: 32, 48>}, {pipeline_mode = #tpu.pipeline_mode<synchronous>, transform_indices = @transform_1, window_bounds = array<i64: 48, 128>}, {pipeline_mode = #tpu.pipeline_mode<synchronous>, transform_indices = @transform_2, window_bounds = array<i64: 1, 128>}, {transform_indices = @transform_3, window_bounds = array<i64: 32, 128>}]} {
    %c0 = arith.constant 0 : index
    %c0_0 = arith.constant 0 : index
    %0 = vector.load %arg1[%c0, %c0_0] : memref<32x48xbf16, #tpu.memory_space<vmem>>, vector<32x48xbf16>
    %c0_1 = arith.constant 0 : index
    %c0_2 = arith.constant 0 : index
    %1 = vector.load %arg2[%c0_1, %c0_2] : memref<48x128xbf16, #tpu.memory_space<vmem>>, vector<48x128xbf16>
    %cst = arith.constant dense<0.000000e+00> : vector<32x128xf32>
    %2 = tpu.matmul %0, %1, %cst {dimension_numbers = #tpu.dot_dimension_numbers<[1], [0], [0], [1], [0, 0, 1, 1], [], []>} : vector<32x48xbf16>, vector<48x128xbf16>, vector<32x128xf32> -> vector<32x128xf32>
    %c0_3 = arith.constant 0 : index
    %c0_4 = arith.constant 0 : index
    %3 = vector.load %arg3[%c0_3, %c0_4] : memref<1x128xf32, #tpu.memory_space<vmem>>, vector<1x128xf32>
    %4 = vector.broadcast %3 : vector<1x128xf32> to vector<32x128xf32>
    %5 = arith.addf %2, %4 : vector<32x128xf32>
    %c0_5 = arith.constant 0 : index
    %c0_6 = arith.constant 0 : index
    %6 = vector.load %arg4[%c0_5, %c0_6] : memref<32x128xf32, #tpu.memory_space<vmem>>, vector<32x128xf32>
    tpu.vector_store %arg4[%c0_5, %c0_6], %5 {strides = array<i32>} : memref<32x128xf32, #tpu.memory_space<vmem>>, vector<32x128xf32>,
    return
  }
  func.func @transform_0(%arg0: i32) -> (i32, i32) {
    %c0_i32 = arith.constant 0 : i32
    %c0_i32_0 = arith.constant 0 : i32
    return %arg0, %c0_i32 : i32, i32
  }
  func.func @transform_1(%arg0: i32) -> (i32, i32) {
    %c0_i32 = arith.constant 0 : i32
    %c0_i32_0 = arith.constant 0 : i32
    %c0_i32_1 = arith.constant 0 : i32
    return %c0_i32, %c0_i32_0 : i32, i32
  }
  func.func @transform_2(%arg0: i32) -> (i32, i32) {
    %c0_i32 = arith.constant 0 : i32
    %c0_i32_0 = arith.constant 0 : i32
    %c0_i32_1 = arith.constant 0 : i32
    return %c0_i32, %c0_i32_0 : i32, i32
  }
  func.func @transform_3(%arg0: i32) -> (i32, i32) {
    %c0_i32 = arith.constant 0 : i32
    %c0_i32_0 = arith.constant 0 : i32
    return %arg0, %c0_i32 : i32, i32
  }
}

module attributes {stable_mosaic.version = 11 : i64} {
  func.func @_patch_embed_kernel(%arg0: i32, %arg1: memref<32x48xbf16, #tpu.memory_space<vmem>>, %arg2: memref<48x128xbf16, #tpu.memory_space<vmem>>, %arg3: memref<1x128xf32, #tpu.memory_space<vmem>>, %arg4: memref<32x128xf32, #tpu.memory_space<vmem>>) attributes {dimension_semantics = [#tpu.dimension_semantics<parallel>], iteration_bounds = array<i64: 1>, scalar_prefetch = 0 : i64, scratch_operands = 0 : i64, tpu.core_type = #tpu.core_type<tc>, window_params = [{transform_indices = @transform_0, window_bounds = array<i64: 32, 48>}, {pipeline_mode = #tpu.pipeline_mode<synchronous>, transform_indices = @transform_1, window_bounds = array<i64: 48, 128>}, {pipeline_mode = #tpu.pipeline_mode<synchronous>, transform_indices = @transform_2, window_bounds = array<i64: 1, 128>}, {transform_indices = @transform_3, window_bounds = array<i64: 32, 128>}]} {
    %c0 = arith.constant 0 : index
    %c0_0 = arith.constant 0 : index
    %0 = vector.load %arg1[%c0, %c0_0] : memref<32x48xbf16, #tpu.memory_space<vmem>>, vector<32x48xbf16>
    %c0_1 = arith.constant 0 : index
    %c0_2 = arith.constant 0 : index
    %1 = vector.load %arg2[%c0_1, %c0_2] : memref<48x128xbf16, #tpu.memory_space<vmem>>, vector<48x128xbf16>
    %cst = arith.constant dense<0.000000e+00> : vector<32x128xf32>
    %2 = tpu.matmul %0, %1, %cst {dimension_numbers = #tpu.dot_dimension_numbers<[1], [0], [0], [1], [0, 0, 1, 1], [], []>} : vector<32x48xbf16>, vector<48x128xbf16>, vector<32x128xf32> -> vector<32x128xf32>
    %c0_3 = arith.constant 0 : index
    %c0_4 = arith.constant 0 : index
    %3 = vector.load %arg3[%c0_3, %c0_4] : memref<1x128xf32, #tpu.memory_space<vmem>>, vector<1x128xf32>
    %4 = vector.broadcast %3 : vector<1x128xf32> to vector<32x128xf32>
    %5 = arith.addf %2, %4 : vector<32x128xf32>
    %c0_5 = arith.constant 0 : index
    %c0_6 = arith.constant 0 : index
    %6 = vector.load %arg4[%c0_5, %c0_6] : memref<32x128xf32, #tpu.memory_space<vmem>>, vector<32x128xf32>
    tpu.vector_store %arg4[%c0_5, %c0_6], %5 {strides = array<i32>} : memref<32x128xf32, #tpu.memory_space<vmem>>, vector<32x128xf32>,
    return
  }
  func.func @transform_0(%arg0: i32) -> (i32, i32) {
    %c0_i32 = arith.constant 0 : i32
    %c0_i32_0 = arith.constant 0 : i32
    return %arg0, %c0_i32 : i32, i32
  }
  func.func @transform_1(%arg0: i32) -> (i32, i32) {
    %c0_i32 = arith.constant 0 : i32
    %c0_i32_0 = arith.constant 0 : i32
    %c0_i32_1 = arith.constant 0 : i32
    return %c0_i32, %c0_i32_0 : i32, i32
  }
  func.func @transform_2(%arg0: i32) -> (i32, i32) {
    %c0_i32 = arith.constant 0 : i32
    %c0_i32_0 = arith.constant 0 : i32
    %c0_i32_1 = arith.constant 0 : i32
    return %c0_i32, %c0_i32_0 : i32, i32
  }
  func.func @transform_3(%arg0: i32) -> (i32, i32) {
    %c0_i32 = arith.constant 0 : i32
    %c0_i32_0 = arith.constant 0 : i32
    return %arg0, %c0_i32 : i32, i32
  }
}

</mosaic_0001>

<llo_original>
// kernel: tpu_custom_call.1
$region0: #{tpu_custom_call.1}
  #allocation0 [shape = 'u32[]', space=smem, size = 0x4, offset = 0x4, fixed_abs, tag = 'smem constant byte address 0x4 - core index']
  #allocation1 [shape = 'u32[144,128]{1,0:T(1,128)}', space=vmem, size = 0x12000, scoped, tag = 'internal scratch']
  %s0 = inlined_call_operand.hbm [shape: bf16[32,48], index: 0, kind: input, shape index: {}]
  %s1 = inlined_call_operand.hbm [shape: bf16[48,128], index: 1, kind: input, shape index: {}]
  %s2 = inlined_call_operand.vmem [shape: f32[1,128], index: 2, kind: input, shape index: {}]
  %s3 = inlined_call_operand.hbm [shape: f32[32,128], index: 3, kind: output, shape index: {}]
  %s4 = sld [smem:[#allocation0]]
  $region30: #{tpu_custom_call.1} parent=0
    _
  %s6 = ssub.s32 1, %s4
  %s7 = scalar_select 0, %s6, %s4
  $region1: #{tpu_custom_call.1} parent=0
    #allocation2 [shape = 'u8[8192]{0}', space=vmem, size = 0x2000, scoped, tag = 'input window, operand 0, single buffered']
    #allocation3 [shape = 's32[1]{0}', space=sflag, size = 0x4, scoped, tag = 'scoped memory for tpu_custom_call.1']
    #allocation4 [shape = 's32[1]{0}', space=sflag, size = 0x4, scoped, tag = 'scoped memory for tpu_custom_call.1']
    #allocation5 [shape = 'u8[12288]{0}', space=vmem, size = 0x3000, scoped, tag = 'input window, operand 1, single buffered']
    #allocation6 [shape = 's32[1]{0}', space=sflag, size = 0x4, scoped, tag = 'scoped memory for tpu_custom_call.1']
    #allocation7 [shape = 'u8[16384]{0}', space=vmem, size = 0x4000, scoped, tag = 'output window, operand 0, single buffered']
    %8 = vsyncpa [#allocation3], 0
    %9 = vsyncpa [#allocation6], 0
    %10 = vsyncpa [#allocation4], 0
    // Predicated region
    $region2: #{tpu_custom_call.1} parent=1 // pred_check
      _
    $region3: #{tpu_custom_call.1} parent=1 // pred_check_branch
      %12 = sbr.rel (0) target = $region5
    $region4: #{tpu_custom_call.1} parent=1 // pred_region
      %s14 = ssub.s32 256, 256
      %15 = vsyncadd [#allocation3], %s14
      %s16 = sshll.u32 [#allocation2], 4
      %s17 = int_to_ptr.vmem [resolvable:$true] %s16
      %22 = dma.hbm_to_vmem [thread:$0]  %s0, 256, %s17, [#allocation3], 64, 64, 4
    $region5: #{tpu_custom_call.1} parent=1 // pred_fallthru
      _
    // Predicated region
    $region6: #{tpu_custom_call.1} parent=1 // pred_check
      _
    $region7: #{tpu_custom_call.1} parent=1 // pred_check_branch
      %24 = sbr.rel (0) target = $region9
    $region8: #{tpu_custom_call.1} parent=1 // pred_region
      %s26 = ssub.s32 384, 384
      %27 = vsyncadd [#allocation6], %s26
      %s28 = sshll.u32 [#allocation5], 4
      %s29 = int_to_ptr.vmem [resolvable:$true] %s28
      %34 = dma.hbm_to_vmem [thread:$0]  %s1, 384, %s29, [#allocation6], 64, 64, 4
    $region9: #{tpu_custom_call.1} parent=1 // pred_fallthru
      _
    // Predicated region
    $region10: #{tpu_custom_call.1} parent=1 // pred_check
      _
    $region11: #{tpu_custom_call.1} parent=1 // pred_check_branch
      %36 = sbr.rel (0) target = $region13
    $region12: #{tpu_custom_call.1} parent=1 // pred_region
      _
    $region13: #{tpu_custom_call.1} parent=1 // pred_fallthru
      _
    // Predicated region
    $region14: #{tpu_custom_call.1} parent=1 // pred_check
      _
    $region15: #{tpu_custom_call.1} parent=1 // pred_check_branch
      %38 = sbr.rel (0) target = $region17
    $region16: #{tpu_custom_call.1} parent=1 // pred_region
      %39 = dma.done [#allocation3], 256
    $region17: #{tpu_custom_call.1} parent=1 // pred_fallthru
      _
    // Predicated region
    $region18: #{tpu_custom_call.1} parent=1 // pred_check
      _
    $region19: #{tpu_custom_call.1} parent=1 // pred_check_branch
      %41 = sbr.rel (0) target = $region21
    $region20: #{tpu_custom_call.1} parent=1 // pred_region
      %42 = dma.done [#allocation6], 384
    $region21: #{tpu_custom_call.1} parent=1 // pred_fallthru
      _
    %v44 = vld [vmem:[#allocation2] sm:$0xf]
    %v45 = vld [vmem:[#allocation2 + $0x4] sm:$0xf]
    %v46 = vld [vmem:[#allocation2 + $0x8] sm:$0xf]
    %v47 = vld [vmem:[#allocation2 + $0xc] sm:$0xf]
    %v48 = vld [vmem:[#allocation5] sm:$0xf]
    %v49 = vld [vmem:[#allocation5 + $0x4] sm:$0xf]
    %v50 = vld [vmem:[#allocation5 + $0x8] sm:$0xf]
    %v51 = vld [vmem:[#allocation5 + $0xc] sm:$0xf]
    %v52 = vld [vmem:[#allocation5 + $0x10] sm:$0xf]
    %v53 = vld [vmem:[#allocation5 + $0x14] sm:$0xf]
    %v54 = vld [vmem:[%s2] sm:$0x1]
    %v56 = vlaneseq
    %v57 = vshrl.u32 %v56, 7
    %v58 = vsub.s32 0, %v57
    %v59 = vrot.slane %v54, %v58
    %v65 = vunpack.c.l.b16 %v44
    %v66 = vunpack.c.l.b16 %v45
    %v67 = vunpack.c.l.b16 %v46
    %v68 = vunpack.c.l.b16 %v47
    %v69 = vpack.c.b16 %v66, %v65
    %v70 = vpack.c.b16 %v68, %v67
    %v77 = vunpack.c.l.b16 %v48
    %v78 = vunpack.c.l.b16 %v49
    %v79 = vunpack.c.l.b16 %v50
    %v80 = vunpack.c.l.b16 %v51
    %v81 = vunpack.c.l.b16 %v52
    %v82 = vunpack.c.l.b16 %v53
    %v83 = vpack.c.b16 %v78, %v77
    %v84 = vpack.c.b16 %v80, %v79
    %v85 = vpack.c.b16 %v82, %v81
    %vm89 = vcmask 392192
    %v91 = vsel %vm89, %v69, 0
    %v94 = vsel %vm89, %v70, 0
    %96 = vmatprep.subr.bf16.mxu0 0
    %97 = vmatpush1.bf16.msra.mxu0 %v83
    %98 = vmatprep.subr.bf16.mxu0 0
    %99 = vmatpush1.bf16.msra.mxu0 %v84
    %100 = vmatprep.subr.bf16.mxu0 0
    %101 = vmatpush1.bf16.msra.mxu0 %v85
    %102 = vmatprep.subr.bf16.mxu0 0
    %103 = vmatpush1.bf16.msra.mxu0 0
    %104 = vmatprep.subr.bf16.mxu0 0
    %105 = vmatpush1.bf16.msra.mxu0 0
    %106 = vmatprep.subr.bf16.mxu0 0
    %107 = vmatpush1.bf16.msra.mxu0 0
    %108 = vmatprep.subr.bf16.mxu0 0
    %109 = vmatpush1.bf16.msra.mxu0 0
    %110 = vmatprep.subr.bf16.mxu0 0
    %111 = vmatpush1.bf16.msra.mxu0 0
    %112 = vmatprep.subr.bf16.mxu0 0
    %113 = vmatpush1.bf16.msra.mxu0 0
    %114 = vmatprep.subr.bf16.mxu0 0
    %115 = vmatpush1.bf16.msra.mxu0 0
    %116 = vmatprep.subr.bf16.mxu0 0
    %117 = vmatpush1.bf16.msra.mxu0 0
    %118 = vmatprep.subr.bf16.mxu0 0
    %119 = vmatpush1.bf16.msra.mxu0 0
    %120 = vmatprep.subr.bf16.mxu0 0
    %121 = vmatpush1.bf16.msra.mxu0 0
    %122 = vmatprep.subr.bf16.mxu0 0
    %123 = vmatpush1.bf16.msra.mxu0 0
    %124 = vmatprep.subr.bf16.mxu0 0
    %125 = vmatpush1.bf16.msra.mxu0 0
    %126 = vmatprep.subr.bf16.mxu0 0
    %127 = vmatpush1.bf16.msra.mxu0 0
    %128 = vmatprep.mubr.bf16.mxu0 0
    %129 = vmatmul.mubr.bf16.gmra.mrb[0].mxu0 %v91
    %v130 = vpop.f32.mrb[0].mxu0
    %v131 = vadd.f32 %v59, %v130
    %v132 = vpop.f32.mrb[0].mxu0
    %v133 = vpop.f32.mrb[0].mxu0
    %v134 = vadd.f32 %v59, %v133
    %v135 = vpop.f32.mrb[0].mxu0
    %136 = vmatprep.mubr.bf16.mxu0 0
    %137 = vmatmul.mubr.bf16.gmra.mrb[0].mxu0 %v94
    %v138 = vpop.f32.mrb[0].mxu0
    %v139 = vadd.f32 %v59, %v138
    %v140 = vpop.f32.mrb[0].mxu0
    %v141 = vpop.f32.mrb[0].mxu0
    %v142 = vadd.f32 %v59, %v141
    %v143 = vpop.f32.mrb[0].mxu0
    %144 = vdwg.mxu0
    %145 = vst [vmem:[#allocation7] sm:$0xff] %v131
    %146 = vst [vmem:[#allocation7 + $0x8] sm:$0xff] %v134
    %147 = vst [vmem:[#allocation7 + $0x10] sm:$0xff] %v139
    %148 = vst [vmem:[#allocation7 + $0x18] sm:$0xff] %v142
    // Predicated region
    $region22: #{tpu_custom_call.1} parent=1 // pred_check
      _
    $region23: #{tpu_custom_call.1} parent=1 // pred_check_branch
      %150 = sbr.rel (0) target = $region25
    $region24: #{tpu_custom_call.1} parent=1 // pred_region
      %s152 = ssub.s32 512, 512
      %153 = vsyncadd [#allocation4], %s152
      %s154 = sshll.u32 [#allocation7], 4
      %s155 = int_to_ptr.vmem [resolvable:$true] %s154
      %160 = dma.vmem_to_hbm [thread:$0]  %s155, 512, %s3, [#allocation4], 128, 128, 8
    $region25: #{tpu_custom_call.1} parent=1 // pred_fallthru
      _
    // Predicated region
    $region26: #{tpu_custom_call.1} parent=1 // pred_check
      _
    $region27: #{tpu_custom_call.1} parent=1 // pred_check_branch
      %162 = sbr.rel (0) target = $region29
    $region28: #{tpu_custom_call.1} parent=1 // pred_region
      %163 = dma.done [#allocation4], 512
    $region29: #{tpu_custom_call.1} parent=1 // pred_fallthru
      _
    %164 = vsyncpa [#allocation3], 1
    %165 = vsyncpa [#allocation6], 1
    %166 = vsyncpa [#allocation4], 1

// kernel: tpu_custom_call.1
$region0: #{tpu_custom_call.1}
  #allocation0 [shape = 'u32[]', space=smem, size = 0x4, offset = 0x4, fixed_abs, tag = 'smem constant byte address 0x4 - core index']
  #allocation1 [shape = 'u32[144,128]{1,0:T(1,128)}', space=vmem, size = 0x12000, scoped, tag = 'internal scratch']
  %s0 = inlined_call_operand.hbm [shape: bf16[32,48], index: 0, kind: input, shape index: {}]
  %s1 = inlined_call_operand.hbm [shape: bf16[48,128], index: 1, kind: input, shape index: {}]
  %s2 = inlined_call_operand.vmem [shape: f32[1,128], index: 2, kind: input, shape index: {}]
  %s3 = inlined_call_operand.hbm [shape: f32[32,128], index: 3, kind: output, shape index: {}]
  %s4 = sld [smem:[#allocation0]]
  $region30: #{tpu_custom_call.1} parent=0
    _
  %s6 = ssub.s32 1, %s4
  %s7 = scalar_select 0, %s6, %s4
  $region1: #{tpu_custom_call.1} parent=0
    #allocation2 [shape = 'u8[8192]{0}', space=vmem, size = 0x2000, scoped, tag = 'input window, operand 0, single buffered']
    #allocation3 [shape = 's32[1]{0}', space=sflag, size = 0x4, scoped, tag = 'scoped memory for tpu_custom_call.1']
    #allocation4 [shape = 's32[1]{0}', space=sflag, size = 0x4, scoped, tag = 'scoped memory for tpu_custom_call.1']
    #allocation5 [shape = 'u8[12288]{0}', space=vmem, size = 0x3000, scoped, tag = 'input window, operand 1, single buffered']
    #allocation6 [shape = 's32[1]{0}', space=sflag, size = 0x4, scoped, tag = 'scoped memory for tpu_custom_call.1']
    #allocation7 [shape = 'u8[16384]{0}', space=vmem, size = 0x4000, scoped, tag = 'output window, operand 0, single buffered']
    %8 = vsyncpa [#allocation3], 0
    %9 = vsyncpa [#allocation6], 0
    %10 = vsyncpa [#allocation4], 0
    // Predicated region
    $region2: #{tpu_custom_call.1} parent=1 // pred_check
      _
    $region3: #{tpu_custom_call.1} parent=1 // pred_check_branch
      %12 = sbr.rel (0) target = $region5
    $region4: #{tpu_custom_call.1} parent=1 // pred_region
      %s14 = ssub.s32 256, 256
      %15 = vsyncadd [#allocation3], %s14
      %s16 = sshll.u32 [#allocation2], 4
      %s17 = int_to_ptr.vmem [resolvable:$true] %s16
      %22 = dma.hbm_to_vmem [thread:$0]  %s0, 256, %s17, [#allocation3], 64, 64, 4
    $region5: #{tpu_custom_call.1} parent=1 // pred_fallthru
      _
    // Predicated region
    $region6: #{tpu_custom_call.1} parent=1 // pred_check
      _
    $region7: #{tpu_custom_call.1} parent=1 // pred_check_branch
      %24 = sbr.rel (0) target = $region9
    $region8: #{tpu_custom_call.1} parent=1 // pred_region
      %s26 = ssub.s32 384, 384
      %27 = vsyncadd [#allocation6], %s26
      %s28 = sshll.u32 [#allocation5], 4
      %s29 = int_to_ptr.vmem [resolvable:$true] %s28
      %34 = dma.hbm_to_vmem [thread:$0]  %s1, 384, %s29, [#allocation6], 64, 64, 4
    $region9: #{tpu_custom_call.1} parent=1 // pred_fallthru
      _
    // Predicated region
    $region10: #{tpu_custom_call.1} parent=1 // pred_check
      _
    $region11: #{tpu_custom_call.1} parent=1 // pred_check_branch
      %36 = sbr.rel (0) target = $region13
    $region12: #{tpu_custom_call.1} parent=1 // pred_region
      _
    $region13: #{tpu_custom_call.1} parent=1 // pred_fallthru
      _
    // Predicated region
    $region14: #{tpu_custom_call.1} parent=1 // pred_check
      _
    $region15: #{tpu_custom_call.1} parent=1 // pred_check_branch
      %38 = sbr.rel (0) target = $region17
    $region16: #{tpu_custom_call.1} parent=1 // pred_region
      %39 = dma.done [#allocation3], 256
    $region17: #{tpu_custom_call.1} parent=1 // pred_fallthru
      _
    // Predicated region
    $region18: #{tpu_custom_call.1} parent=1 // pred_check
      _
    $region19: #{tpu_custom_call.1} parent=1 // pred_check_branch
      %41 = sbr.rel (0) target = $region21
    $region20: #{tpu_custom_call.1} parent=1 // pred_region
      %42 = dma.done [#allocation6], 384
    $region21: #{tpu_custom_call.1} parent=1 // pred_fallthru
      _
    %v44 = vld [vmem:[#allocation2] sm:$0xf]
    %v45 = vld [vmem:[#allocation2 + $0x4] sm:$0xf]
    %v46 = vld [vmem:[#allocation2 + $0x8] sm:$0xf]
    %v47 = vld [vmem:[#allocation2 + $0xc] sm:$0xf]
    %v48 = vld [vmem:[#allocation5] sm:$0xf]
    %v49 = vld [vmem:[#allocation5 + $0x4] sm:$0xf]
    %v50 = vld [vmem:[#allocation5 + $0x8] sm:$0xf]
    %v51 = vld [vmem:[#allocation5 + $0xc] sm:$0xf]
    %v52 = vld [vmem:[#allocation5 + $0x10] sm:$0xf]
    %v53 = vld [vmem:[#allocation5 + $0x14] sm:$0xf]
    %v54 = vld [vmem:[%s2] sm:$0x1]
    %v56 = vlaneseq
    %v57 = vshrl.u32 %v56, 7
    %v58 = vsub.s32 0, %v57
    %v59 = vrot.slane %v54, %v58
    %v65 = vunpack.c.l.b16 %v44
    %v66 = vunpack.c.l.b16 %v45
    %v67 = vunpack.c.l.b16 %v46
    %v68 = vunpack.c.l.b16 %v47
    %v69 = vpack.c.b16 %v66, %v65
    %v70 = vpack.c.b16 %v68, %v67
    %v77 = vunpack.c.l.b16 %v48
    %v78 = vunpack.c.l.b16 %v49
    %v79 = vunpack.c.l.b16 %v50
    %v80 = vunpack.c.l.b16 %v51
    %v81 = vunpack.c.l.b16 %v52
    %v82 = vunpack.c.l.b16 %v53
    %v83 = vpack.c.b16 %v78, %v77
    %v84 = vpack.c.b16 %v80, %v79
    %v85 = vpack.c.b16 %v82, %v81
    %vm89 = vcmask 392192
    %v91 = vsel %vm89, %v69, 0
    %v94 = vsel %vm89, %v70, 0
    %96 = vmatprep.subr.bf16.mxu0 0
    %97 = vmatpush1.bf16.msra.mxu0 %v83
    %98 = vmatprep.subr.bf16.mxu0 0
    %99 = vmatpush1.bf16.msra.mxu0 %v84
    %100 = vmatprep.subr.bf16.mxu0 0
    %101 = vmatpush1.bf16.msra.mxu0 %v85
    %102 = vmatprep.subr.bf16.mxu0 0
    %103 = vmatpush1.bf16.msra.mxu0 0
    %104 = vmatprep.subr.bf16.mxu0 0
    %105 = vmatpush1.bf16.msra.mxu0 0
    %106 = vmatprep.subr.bf16.mxu0 0
    %107 = vmatpush1.bf16.msra.mxu0 0
    %108 = vmatprep.subr.bf16.mxu0 0
    %109 = vmatpush1.bf16.msra.mxu0 0
    %110 = vmatprep.subr.bf16.mxu0 0
    %111 = vmatpush1.bf16.msra.mxu0 0
    %112 = vmatprep.subr.bf16.mxu0 0
    %113 = vmatpush1.bf16.msra.mxu0 0
    %114 = vmatprep.subr.bf16.mxu0 0
    %115 = vmatpush1.bf16.msra.mxu0 0
    %116 = vmatprep.subr.bf16.mxu0 0
    %117 = vmatpush1.bf16.msra.mxu0 0
    %118 = vmatprep.subr.bf16.mxu0 0
    %119 = vmatpush1.bf16.msra.mxu0 0
    %120 = vmatprep.subr.bf16.mxu0 0
    %121 = vmatpush1.bf16.msra.mxu0 0
    %122 = vmatprep.subr.bf16.mxu0 0
    %123 = vmatpush1.bf16.msra.mxu0 0
    %124 = vmatprep.subr.bf16.mxu0 0
    %125 = vmatpush1.bf16.msra.mxu0 0
    %126 = vmatprep.subr.bf16.mxu0 0
    %127 = vmatpush1.bf16.msra.mxu0 0
    %128 = vmatprep.mubr.bf16.mxu0 0
    %129 = vmatmul.mubr.bf16.gmra.mrb[0].mxu0 %v91
    %v130 = vpop.f32.mrb[0].mxu0
    %v131 = vadd.f32 %v59, %v130
    %v132 = vpop.f32.mrb[0].mxu0
    %v133 = vpop.f32.mrb[0].mxu0
    %v134 = vadd.f32 %v59, %v133
    %v135 = vpop.f32.mrb[0].mxu0
    %136 = vmatprep.mubr.bf16.mxu0 0
    %137 = vmatmul.mubr.bf16.gmra.mrb[0].mxu0 %v94
    %v138 = vpop.f32.mrb[0].mxu0
    %v139 = vadd.f32 %v59, %v138
    %v140 = vpop.f32.mrb[0].mxu0
    %v141 = vpop.f32.mrb[0].mxu0
    %v142 = vadd.f32 %v59, %v141
    %v143 = vpop.f32.mrb[0].mxu0
    %144 = vdwg.mxu0
    %145 = vst [vmem:[#allocation7] sm:$0xff] %v131
    %146 = vst [vmem:[#allocation7 + $0x8] sm:$0xff] %v134
    %147 = vst [vmem:[#allocation7 + $0x10] sm:$0xff] %v139
    %148 = vst [vmem:[#allocation7 + $0x18] sm:$0xff] %v142
    // Predicated region
    $region22: #{tpu_custom_call.1} parent=1 // pred_check
      _
    $region23: #{tpu_custom_call.1} parent=1 // pred_check_branch
      %150 = sbr.rel (0) target = $region25
    $region24: #{tpu_custom_call.1} parent=1 // pred_region
      %s152 = ssub.s32 512, 512
      %153 = vsyncadd [#allocation4], %s152
      %s154 = sshll.u32 [#allocation7], 4
      %s155 = int_to_ptr.vmem [resolvable:$true] %s154
      %160 = dma.vmem_to_hbm [thread:$0]  %s155, 512, %s3, [#allocation4], 128, 128, 8
    $region25: #{tpu_custom_call.1} parent=1 // pred_fallthru
      _
    // Predicated region
    $region26: #{tpu_custom_call.1} parent=1 // pred_check
      _
    $region27: #{tpu_custom_call.1} parent=1 // pred_check_branch
      %162 = sbr.rel (0) target = $region29
    $region28: #{tpu_custom_call.1} parent=1 // pred_region
      %163 = dma.done [#allocation4], 512
    $region29: #{tpu_custom_call.1} parent=1 // pred_fallthru
      _
    %164 = vsyncpa [#allocation3], 1
    %165 = vsyncpa [#allocation6], 1
    %166 = vsyncpa [#allocation4], 1

</llo_original>
